<compile_context>
chip_gen: v6e
topology: v6e:2x2x1
jax: 0.10.0
libtpu: 0.0.40
codegen_flags: <defaults>
</compile_context>

<pallas_src>
import jax
import jax.numpy as jnp
from jax.experimental import pallas as pl
from jax.experimental.pallas import tpu as pltpu


_SQRT_HALF = 0.7071067811865476


def _gelu_exact_f32(y):
    # Exact (erf-based) GELU, matching nn.GELU(approximate='none').
    # TODO(synk): a tanh/exp approximation would route this to the EUP slot if
    # the accuracy contract ever allows it.
    return 0.5 * y * (1.0 + jax.lax.erf(y * jnp.float32(_SQRT_HALF)))


def _mlp_resident_kernel(x_ref, wt_ref, b_ref, o_ref):
    # x_ref:  (TM, dim)   rows tile, native dtype (bf16/f32)
    # wt_ref: (dim, TN)   pre-transposed weight slab (grid-invariant when TN==dim)
    # b_ref:  (1, TN)     bias slab
    # o_ref:  (TM, TN)    output tile
    y = jnp.dot(x_ref[...], wt_ref[...], preferred_element_type=jnp.float32)
    y = y + b_ref[...].astype(jnp.float32)
    # Dropout(eval) == identity.
    o_ref[...] = _gelu_exact_f32(y).astype(o_ref.dtype)


def _mlp_ktiled_kernel(x_ref, wt_ref, b_ref, o_ref, acc_ref):
    # Grid (gm, gn, gk); K (contraction) is the innermost, "arbitrary" axis.
    k = pl.program_id(2)

    @pl.when(k == 0)
    def _():
        acc_ref[...] = jnp.zeros_like(acc_ref)

    acc_ref[...] += jnp.dot(x_ref[...], wt_ref[...],
                            preferred_element_type=jnp.float32)

    @pl.when(k == pl.num_programs(2) - 1)
    def _():
        y = acc_ref[...] + b_ref[...].astype(jnp.float32)
        o_ref[...] = _gelu_exact_f32(y).astype(o_ref.dtype)


def _round_up(v, m):
    return ((v + m - 1) // m) * m


def _vmem_limit_bytes():
    """Per-generation VMEM limit (3/4 of capacity: ~96 MiB v5e/v6e, ~48 MiB v7x)."""
    try:
        cap = int(pltpu.get_tpu_info().vmem_capacity_bytes)
    except Exception:
        cap = 64 * 1024 * 1024  # be conservative (v7x) if the query fails
    return min(cap * 3 // 4, 112 * 1024 * 1024)


def _largest_dividing_tile(dim, cap):
    """Largest multiple of 128 that divides `dim`, capped at `cap`."""
    c = (cap // 128) * 128
    while c >= 128:
        if dim % c == 0:
            return c
        c -= 128
    return dim  # no 128-multiple divides dim: fall back to the full axis


def mlp_block(x, weight, bias, *, tile_m=None, tile_n=None, tile_k=None,
              force_k_tiling=False):
    """Linear(dim, dim) -> GELU -> Dropout(eval) on x of shape [..., dim].

    weight: (out_features, in_features) PyTorch layout.  bias: (dim,).
    """
    orig_shape = x.shape
    dim = orig_shape[-1]
    x2d = x.reshape(-1, dim)
    m = x2d.shape[0]

    x_isz = x.dtype.itemsize
    w_isz = weight.dtype.itemsize
    o_isz = x_isz

    # One-time transpose to (in, out) so the kernel never re-transposes the
    # grid-invariant weight through the XLU.
    w_t = weight.T
    bias2d = bias.reshape(1, dim)

    vmem_limit = _vmem_limit_bytes()
    budget = int(vmem_limit * 0.85)   # planning headroom inside the limit

    # ---- row tile -----------------------------------------------------------
    # bf16 packs 16 rows per vreg sublane group (int8/fp8: 32, f32: 8); prefer
    # 256-row granularity for the 256-wide MXUs on v6e/v7x, 512 rows ≈ roofline.
    row_pack = max(8, 32 // x_isz)
    m_pad = _round_up(m, row_pack)
    if tile_m is None:
        tile_m = min(512, m_pad)
        if tile_m > 256:
            tile_m = (tile_m // 256) * 256
    tile_m = max(row_pack, _round_up(min(tile_m, m_pad), row_pack))
    gm = pl.cdiv(m, tile_m)

    w_bytes = dim * dim * w_isz
    x_bytes = m * dim * x_isz
    out_bytes = m * dim * o_isz
    flops = 2 * m * dim * dim
    trans = m * dim   # erf count (undercounts if it lowers to a polynomial)

    # ---- resident-weight vs K-tiled plan ------------------------------------
    single_buffer_w = w_bytes > (2 << 20)   # only worth it for material weights
    if tile_n is not None:
        tile_n_res = tile_n
    elif gm == 1 and dim >= 1024 and dim % 256 == 0:
        # Megacore (v7x): with a single row block, split N so the second
        # TensorCore has a block to run.
        tile_n_res = dim // 2
    else:
        tile_n_res = dim
    w_vmem = w_bytes * (1 if (single_buffer_w and tile_n_res == dim) else 2)
    act_vmem = tile_m * dim * 2 * (x_isz + o_isz) + tile_m * tile_n_res * 4
    resident_fits = (w_vmem + act_vmem) <= budget

    use_k_tiling = force_k_tiling or (not resident_fits and dim % 128 == 0)

    if not use_k_tiling:
        # --- weight-resident path (full-K blocks) ----------------------------
        gn = pl.cdiv(dim, tile_n_res)
        # Grid order (gn, gm): M innermost, so each weight slab streams once
        # (weight-stationary); x rows re-stream gn times (usually gn == 1).
        if gn == 1 and single_buffer_w:
            # Grid-invariant weight: a single VMEM buffer suffices; default
            # double-buffering would waste a full weight-sized buffer.
            w_spec = pl.BlockSpec((dim, dim), lambda j, i: (0, 0),
                                  pipeline_mode=pl.Buffered(buffer_count=1))
            b_spec = pl.BlockSpec((1, dim), lambda j, i: (0, 0),
                                  pipeline_mode=pl.Buffered(buffer_count=1))
        else:
            w_spec = pl.BlockSpec((dim, tile_n_res), lambda j, i: (0, j))
            b_spec = pl.BlockSpec((1, tile_n_res), lambda j, i: (0, j))

        cost = pl.CostEstimate(
            flops=flops, transcendentals=trans,
            bytes_accessed=gn * x_bytes + w_bytes + gn * dim * w_isz + out_bytes)

        out = pl.pallas_call(
            _mlp_resident_kernel,
            out_shape=jax.ShapeDtypeStruct((m, dim), x.dtype),
            grid_spec=pltpu.PrefetchScalarGridSpec(
                num_scalar_prefetch=0,
                grid=(gn, gm),
                in_specs=[
                    pl.BlockSpec((tile_m, dim), lambda j, i: (i, 0)),
                    w_spec,
                    b_spec,
                ],
                out_specs=pl.BlockSpec((tile_m, tile_n_res),
                                       lambda j, i: (i, j)),
            ),
            compiler_params=pltpu.CompilerParams(
                dimension_semantics=("parallel", "parallel"),
                vmem_limit_bytes=vmem_limit,
            ),
            cost_estimate=cost,
        )(x2d, w_t, bias2d)
    else:
        # --- K-tiled accumulator path (large dim) ----------------------------
        # Bounds VMEM independent of dim.  tile_k/tile_n must divide dim (a
        # padded K tail would feed garbage into valid outputs).
        tn = tile_n if tile_n is not None else _largest_dividing_tile(dim, 512)
        tk = tile_k if tile_k is not None else _largest_dividing_tile(dim, 1024)
        gn = pl.cdiv(dim, tn)
        gk = pl.cdiv(dim, tk)

        cost = pl.CostEstimate(
            flops=flops, transcendentals=trans,
            bytes_accessed=(gn * x_bytes + gm * w_bytes + gm * dim * w_isz
                            + out_bytes))

        out = pl.pallas_call(
            _mlp_ktiled_kernel,
            out_shape=jax.ShapeDtypeStruct((m, dim), x.dtype),
            grid_spec=pltpu.PrefetchScalarGridSpec(
                num_scalar_prefetch=0,
                grid=(gm, gn, gk),
                in_specs=[
                    pl.BlockSpec((tile_m, tk), lambda i, j, k: (i, k)),
                    pl.BlockSpec((tk, tn), lambda i, j, k: (k, j)),
                    pl.BlockSpec((1, tn), lambda i, j, k: (0, j)),
                ],
                out_specs=pl.BlockSpec((tile_m, tn), lambda i, j, k: (i, j)),
                scratch_shapes=[pltpu.VMEM((tile_m, tn), jnp.float32)],
            ),
            compiler_params=pltpu.CompilerParams(
                dimension_semantics=("parallel", "parallel", "arbitrary"),
                vmem_limit_bytes=vmem_limit,
            ),
            cost_estimate=cost,
        )(x2d, w_t, bias2d)

    return out.reshape(orig_shape)


def _reference(x, weight, bias):
    y = jnp.einsum("...d,od->...o", x, weight) + bias
    return jax.nn.gelu(y, approximate=False)


if __name__ == "__main__":
    key = jax.random.PRNGKey(0)
    # Small, lane-friendly demo shape (dim multiple of 128).
    batch, seq, dim = 2, 8, 256

    kx, kw, kb = jax.random.split(key, 3)
    bound = 1.0 / (dim ** 0.5)

    # bf16 activations/params: native bf16 x bf16 -> f32 MXU path.
    x = jax.random.normal(kx, (batch, seq, dim),
                          dtype=jnp.float32).astype(jnp.bfloat16)
    weight = jax.random.uniform(kw, (dim, dim), minval=-bound, maxval=bound,
                                dtype=jnp.float32).astype(jnp.bfloat16)  # (out, in)
    bias = jax.random.uniform(kb, (dim,), minval=-bound, maxval=bound,
                              dtype=jnp.float32).astype(jnp.bfloat16)

    # f32 reference from the exact same (bf16-representable) values; error is
    # dominated by the final bf16 output rounding (~2^-8 relative).
    ref = _reference(x.astype(jnp.float32), weight.astype(jnp.float32),
                     bias.astype(jnp.float32))

    # 1) Default plan: weight-resident, weight-stationary grid.
    out = jax.block_until_ready(mlp_block(x, weight, bias))
    assert out.shape == x.shape
    err = float(jnp.max(jnp.abs(out.astype(jnp.float32) - ref)))
    assert err < 3e-2, f"resident path mismatch, max abs err = {err}"

    # 2) Exercise the K-tiled accumulator plan (the large-dim path) at small size.
    out_kt = jax.block_until_ready(
        mlp_block(x, weight, bias, force_k_tiling=True,
                  tile_m=16, tile_n=128, tile_k=128))
    err_kt = float(jnp.max(jnp.abs(out_kt.astype(jnp.float32) - ref)))
    assert err_kt < 3e-2, f"k-tiled path mismatch, max abs err = {err_kt}"

    print("KERNEL_OK")
</pallas_src>

<mosaic_0001>
module attributes {stable_mosaic.version = 11 : i64} {
  func.func @_mlp_resident_kernel(%arg0: i32, %arg1: i32, %arg2: memref<16x256xbf16, #tpu.memory_space<vmem>>, %arg3: memref<256x256xbf16, #tpu.memory_space<vmem>>, %arg4: memref<1x256xbf16, #tpu.memory_space<vmem>>, %arg5: memref<16x256xbf16, #tpu.memory_space<vmem>>) attributes {dimension_semantics = [#tpu.dimension_semantics<parallel>, #tpu.dimension_semantics<parallel>], iteration_bounds = array<i64: 1, 1>, scalar_prefetch = 0 : i64, scratch_operands = 0 : i64, tpu.core_type = #tpu.core_type<tc>, window_params = [{transform_indices = @transform_0, window_bounds = array<i64: 16, 256>}, {transform_indices = @transform_1, window_bounds = array<i64: 256, 256>}, {transform_indices = @transform_2, window_bounds = array<i64: 1, 256>}, {transform_indices = @transform_3, window_bounds = array<i64: 16, 256>}]} {
    %c0 = arith.constant 0 : index
    %c0_0 = arith.constant 0 : index
    %0 = vector.load %arg2[%c0, %c0_0] : memref<16x256xbf16, #tpu.memory_space<vmem>>, vector<16x256xbf16>
    %c0_1 = arith.constant 0 : index
    %c0_2 = arith.constant 0 : index
    %1 = vector.load %arg3[%c0_1, %c0_2] : memref<256x256xbf16, #tpu.memory_space<vmem>>, vector<256x256xbf16>
    %cst = arith.constant dense<0.000000e+00> : vector<16x256xf32>
    %2 = tpu.matmul %0, %1, %cst {dimension_numbers = #tpu.dot_dimension_numbers<[1], [0], [0], [1], [0, 0, 1, 1], [], []>} : vector<16x256xbf16>, vector<256x256xbf16>, vector<16x256xf32> -> vector<16x256xf32>
    %c0_3 = arith.constant 0 : index
    %c0_4 = arith.constant 0 : index
    %3 = vector.load %arg4[%c0_3, %c0_4] : memref<1x256xbf16, #tpu.memory_space<vmem>>, vector<1x256xbf16>
    %4 = arith.extf %3 : vector<1x256xbf16> to vector<1x256xf32>
    %5 = vector.broadcast %4 : vector<1x256xf32> to vector<16x256xf32>
    %6 = arith.addf %2, %5 : vector<16x256xf32>
    %cst_5 = arith.constant 5.000000e-01 : f32
    %7 = vector.broadcast %cst_5 : f32 to vector<16x256xf32>
    %8 = arith.mulf %7, %6 : vector<16x256xf32>
    %cst_6 = arith.constant 0.707106769 : f32
    %9 = vector.broadcast %cst_6 : f32 to vector<16x256xf32>
    %10 = arith.mulf %6, %9 : vector<16x256xf32>
    %11 = math.erf %10 : vector<16x256xf32>
    %cst_7 = arith.constant 1.000000e+00 : f32
    %12 = vector.broadcast %cst_7 : f32 to vector<16x256xf32>
    %13 = arith.addf %12, %11 : vector<16x256xf32>
    %14 = arith.mulf %8, %13 : vector<16x256xf32>
    %15 = arith.truncf %14 : vector<16x256xf32> to vector<16x256xbf16>
    %c0_8 = arith.constant 0 : index
    %c0_9 = arith.constant 0 : index
    %16 = vector.load %arg5[%c0_8, %c0_9] : memref<16x256xbf16, #tpu.memory_space<vmem>>, vector<16x256xbf16>
    tpu.vector_store %arg5[%c0_8, %c0_9], %15 {strides = array<i32>} : memref<16x256xbf16, #tpu.memory_space<vmem>>, vector<16x256xbf16>,
    return
  }
  func.func @transform_0(%arg0: i32, %arg1: i32) -> (i32, i32) {
    %c0_i32 = arith.constant 0 : i32
    %c0_i32_0 = arith.constant 0 : i32
    return %arg1, %c0_i32 : i32, i32
  }
  func.func @transform_1(%arg0: i32, %arg1: i32) -> (i32, i32) {
    %c0_i32 = arith.constant 0 : i32
    %c0_i32_0 = arith.constant 0 : i32
    return %c0_i32, %arg0 : i32, i32
  }
  func.func @transform_2(%arg0: i32, %arg1: i32) -> (i32, i32) {
    %c0_i32 = arith.constant 0 : i32
    %c0_i32_0 = arith.constant 0 : i32
    return %c0_i32, %arg0 : i32, i32
  }
  func.func @transform_3(%arg0: i32, %arg1: i32) -> (i32, i32) {
    %c0_i32 = arith.constant 0 : i32
    return %arg1, %arg0 : i32, i32
  }
}

</mosaic_0001>

<llo_original>
// kernel: tpu_custom_call.1
$region0: #{tpu_custom_call.1}
  #allocation0 [shape = 'u32[]', space=smem, size = 0x4, offset = 0x4, fixed_abs, tag = 'smem constant byte address 0x4 - core index']
  #allocation1 [shape = 'u32[144,128]{1,0:T(1,128)}', space=vmem, size = 0x12000, scoped, tag = 'internal scratch']
  %s0 = inlined_call_operand.hbm [shape: bf16[16,256], index: 0, kind: input, shape index: {}]
  %s1 = inlined_call_operand.hbm [shape: bf16[256,256], index: 1, kind: input, shape index: {}]
  %s2 = inlined_call_operand.vmem [shape: bf16[1,256], index: 2, kind: input, shape index: {}]
  %s3 = inlined_call_operand.hbm [shape: bf16[16,256], index: 3, kind: output, shape index: {}]
  %s4 = sld [smem:[#allocation0]]
  $region30: #{tpu_custom_call.1} parent=0
    _
  %s6 = ssub.s32 1, %s4
  %s7 = scalar_select 0, %s6, %s4
  $region1: #{tpu_custom_call.1} parent=0
    #allocation2 [shape = 'u8[8192]{0}', space=vmem, size = 0x2000, scoped, tag = 'input window, operand 0, single buffered']
    #allocation3 [shape = 's32[1]{0}', space=sflag, size = 0x4, scoped, tag = 'scoped memory for tpu_custom_call.1']
    #allocation4 [shape = 's32[1]{0}', space=sflag, size = 0x4, scoped, tag = 'scoped memory for tpu_custom_call.1']
    #allocation5 [shape = 'u8[131072]{0}', space=vmem, size = 0x20000, scoped, tag = 'input window, operand 1, single buffered']
    #allocation6 [shape = 's32[1]{0}', space=sflag, size = 0x4, scoped, tag = 'scoped memory for tpu_custom_call.1']
    #allocation7 [shape = 'u8[8192]{0}', space=vmem, size = 0x2000, scoped, tag = 'output window, operand 0, single buffered']
    %8 = vsyncpa [#allocation3], 0
    %9 = vsyncpa [#allocation6], 0
    %10 = vsyncpa [#allocation4], 0
    // Predicated region
    $region2: #{tpu_custom_call.1} parent=1 // pred_check
      _
    $region3: #{tpu_custom_call.1} parent=1 // pred_check_branch
      %12 = sbr.rel (0) target = $region5
    $region4: #{tpu_custom_call.1} parent=1 // pred_region
      %s14 = ssub.s32 256, 256
      %15 = vsyncadd [#allocation3], %s14
      %s16 = sshll.u32 [#allocation2], 4
      %s17 = int_to_ptr.vmem [resolvable:$true] %s16
      %22 = dma.hbm_to_vmem [thread:$0]  %s0, 256, %s17, [#allocation3], 128, 128, 8
    $region5: #{tpu_custom_call.1} parent=1 // pred_fallthru
      _
    // Predicated region
    $region6: #{tpu_custom_call.1} parent=1 // pred_check
      _
    $region7: #{tpu_custom_call.1} parent=1 // pred_check_branch
      %24 = sbr.rel (0) target = $region9
    $region8: #{tpu_custom_call.1} parent=1 // pred_region
      %s26 = ssub.s32 4096, 4096
      %27 = vsyncadd [#allocation6], %s26
      %s28 = sshll.u32 [#allocation5], 4
      %s29 = int_to_ptr.vmem [resolvable:$true] %s28
      %34 = dma.hbm_to_vmem [thread:$0]  %s1, 4096, %s29, [#allocation6], 128, 128, 8
    $region9: #{tpu_custom_call.1} parent=1 // pred_fallthru
      _
    // Predicated region
    $region10: #{tpu_custom_call.1} parent=1 // pred_check
      _
    $region11: #{tpu_custom_call.1} parent=1 // pred_check_branch
      %36 = sbr.rel (0) target = $region13
    $region12: #{tpu_custom_call.1} parent=1 // pred_region
      _
    $region13: #{tpu_custom_call.1} parent=1 // pred_fallthru
      _
    // Predicated region
    $region14: #{tpu_custom_call.1} parent=1 // pred_check
      _
    $region15: #{tpu_custom_call.1} parent=1 // pred_check_branch
      %38 = sbr.rel (0) target = $region17
    $region16: #{tpu_custom_call.1} parent=1 // pred_region
      %39 = dma.done [#allocation3], 256
    $region17: #{tpu_custom_call.1} parent=1 // pred_fallthru
      _
    // Predicated region
    $region18: #{tpu_custom_call.1} parent=1 // pred_check
      _
    $region19: #{tpu_custom_call.1} parent=1 // pred_check_branch
      %41 = sbr.rel (0) target = $region21
    $region20: #{tpu_custom_call.1} parent=1 // pred_region
      %42 = dma.done [#allocation6], 4096
    $region21: #{tpu_custom_call.1} parent=1 // pred_fallthru
      _
    %v43 = vld [vmem:[#allocation2] sm:$0xff]
    %v44 = vld [vmem:[#allocation2 + $0x8] sm:$0xff]
    %v45 = vld [vmem:[#allocation5] sm:$0xff]
    %v46 = vld [vmem:[#allocation5 + $0x8] sm:$0xff]
    %v47 = vld [vmem:[#allocation5 + $0x10] sm:$0xff]
    %v48 = vld [vmem:[#allocation5 + $0x18] sm:$0xff]
    %v49 = vld [vmem:[#allocation5 + $0x20] sm:$0xff]
    %v50 = vld [vmem:[#allocation5 + $0x28] sm:$0xff]
    %v51 = vld [vmem:[#allocation5 + $0x30] sm:$0xff]
    %v52 = vld [vmem:[#allocation5 + $0x38] sm:$0xff]
    %v53 = vld [vmem:[#allocation5 + $0x40] sm:$0xff]
    %v54 = vld [vmem:[#allocation5 + $0x48] sm:$0xff]
    %v55 = vld [vmem:[#allocation5 + $0x50] sm:$0xff]
    %v56 = vld [vmem:[#allocation5 + $0x58] sm:$0xff]
    %v57 = vld [vmem:[#allocation5 + $0x60] sm:$0xff]
    %v58 = vld [vmem:[#allocation5 + $0x68] sm:$0xff]
    %v59 = vld [vmem:[#allocation5 + $0x70] sm:$0xff]
    %v60 = vld [vmem:[#allocation5 + $0x78] sm:$0xff]
    %v61 = vld [vmem:[#allocation5 + $0x80] sm:$0xff]
    %v62 = vld [vmem:[#allocation5 + $0x88] sm:$0xff]
    %v63 = vld [vmem:[#allocation5 + $0x90] sm:$0xff]
    %v64 = vld [vmem:[#allocation5 + $0x98] sm:$0xff]
    %v65 = vld [vmem:[#allocation5 + $0xa0] sm:$0xff]
    %v66 = vld [vmem:[#allocation5 + $0xa8] sm:$0xff]
    %v67 = vld [vmem:[#allocation5 + $0xb0] sm:$0xff]
    %v68 = vld [vmem:[#allocation5 + $0xb8] sm:$0xff]
    %v69 = vld [vmem:[#allocation5 + $0xc0] sm:$0xff]
    %v70 = vld [vmem:[#allocation5 + $0xc8] sm:$0xff]
    %v71 = vld [vmem:[#allocation5 + $0xd0] sm:$0xff]
    %v72 = vld [vmem:[#allocation5 + $0xd8] sm:$0xff]
    %v73 = vld [vmem:[#allocation5 + $0xe0] sm:$0xff]
    %v74 = vld [vmem:[#allocation5 + $0xe8] sm:$0xff]
    %v75 = vld [vmem:[#allocation5 + $0xf0] sm:$0xff]
    %v76 = vld [vmem:[#allocation5 + $0xf8] sm:$0xff]
    %v77 = vld [vmem:[%s2] sm:$0x3]
    %v78 = vunpack.c.l.bf16 %v77
    %v80 = vlaneseq
    %v81 = vshrl.u32 %v80, 7
    %v82 = vsub.s32 0, %v81
    %v83 = vrot.slane %v78, %v82
    %v84 = vlaneseq
    %v85 = vshrl.u32 %v84, 7
    %v86 = vsub.s32 2, %v85
    %v87 = vrot.slane %v78, %v86
    %v90 = vlaneseq
    %v91 = vshrl.u32 %v90, 7
    %v92 = vsub.s32 0, %v91
    %v93 = vrot.slane %v83, %v92
    %v94 = vlaneseq
    %v95 = vshrl.u32 %v94, 7
    %v96 = vsub.s32 0, %v95
    %v97 = vrot.slane %v87, %v96
    %v100 = vunpack.c.l.b16 %v43
    %v101 = vunpack.c.h.b16 %v43
    %v102 = vunpack.c.l.b16 %v44
    %v103 = vunpack.c.h.b16 %v44
    %v104 = vpack.c.b16 %v102, %v100
    %v105 = vpack.c.b16 %v103, %v101
    %v140 = vunpack.c.l.b16 %v45
    %v141 = vunpack.c.h.b16 %v45
    %v142 = vunpack.c.l.b16 %v46
    %v143 = vunpack.c.h.b16 %v46
    %v144 = vunpack.c.l.b16 %v47
    %v145 = vunpack.c.h.b16 %v47
    %v146 = vunpack.c.l.b16 %v48
    %v147 = vunpack.c.h.b16 %v48
    %v148 = vunpack.c.l.b16 %v49
    %v149 = vunpack.c.h.b16 %v49
    %v150 = vunpack.c.l.b16 %v50
    %v151 = vunpack.c.h.b16 %v50
    %v152 = vunpack.c.l.b16 %v51
    %v153 = vunpack.c.h.b16 %v51
    %v154 = vunpack.c.l.b16 %v52
    %v155 = vunpack.c.h.b16 %v52
    %v156 = vunpack.c.l.b16 %v53
    %v157 = vunpack.c.h.b16 %v53
    %v158 = vunpack.c.l.b16 %v54
    %v159 = vunpack.c.h.b16 %v54
    %v160 = vunpack.c.l.b16 %v55
    %v161 = vunpack.c.h.b16 %v55
    %v162 = vunpack.c.l.b16 %v56
    %v163 = vunpack.c.h.b16 %v56
    %v164 = vunpack.c.l.b16 %v57
    %v165 = vunpack.c.h.b16 %v57
    %v166 = vunpack.c.l.b16 %v58
    %v167 = vunpack.c.h.b16 %v58
    %v168 = vunpack.c.l.b16 %v59
    %v169 = vunpack.c.h.b16 %v59
    %v170 = vunpack.c.l.b16 %v60
    %v171 = vunpack.c.h.b16 %v60
    %v172 = vunpack.c.l.b16 %v61
    %v173 = vunpack.c.h.b16 %v61
    %v174 = vunpack.c.l.b16 %v62
    %v175 = vunpack.c.h.b16 %v62
    %v176 = vunpack.c.l.b16 %v63
    %v177 = vunpack.c.h.b16 %v63
    %v178 = vunpack.c.l.b16 %v64
    %v179 = vunpack.c.h.b16 %v64
    %v180 = vunpack.c.l.b16 %v65
    %v181 = vunpack.c.h.b16 %v65
    %v182 = vunpack.c.l.b16 %v66
    %v183 = vunpack.c.h.b16 %v66
    %v184 = vunpack.c.l.b16 %v67
    %v185 = vunpack.c.h.b16 %v67
    %v186 = vunpack.c.l.b16 %v68
    %v187 = vunpack.c.h.b16 %v68
    %v188 = vunpack.c.l.b16 %v69
    %v189 = vunpack.c.h.b16 %v69
    %v190 = vunpack.c.l.b16 %v70
    %v191 = vunpack.c.h.b16 %v70
    %v192 = vunpack.c.l.b16 %v71
    %v193 = vunpack.c.h.b16 %v71
    %v194 = vunpack.c.l.b16 %v72
    %v195 = vunpack.c.h.b16 %v72
    %v196 = vunpack.c.l.b16 %v73
    %v197 = vunpack.c.h.b16 %v73
    %v198 = vunpack.c.l.b16 %v74
    %v199 = vunpack.c.h.b16 %v74
    %v200 = vunpack.c.l.b16 %v75
    %v201 = vunpack.c.h.b16 %v75
    %v202 = vunpack.c.l.b16 %v76
    %v203 = vunpack.c.h.b16 %v76
    %v204 = vpack.c.b16 %v142, %v140
    %v205 = vpack.c.b16 %v143, %v141
    %v206 = vpack.c.b16 %v146, %v144
    %v207 = vpack.c.b16 %v147, %v145
    %v208 = vpack.c.b16 %v150, %v148
    %v209 = vpack.c.b16 %v151, %v149
    %v210 = vpack.c.b16 %v154, %v152
    %v211 = vpack.c.b16 %v155, %v153
    %v212 = vpack.c.b16 %v158, %v156
    %v213 = vpack.c.b16 %v159, %v157
    %v214 = vpack.c.b16 %v162, %v160
    %v215 = vpack.c.b16 %v163, %v161
    %v216 = vpack.c.b16 %v166, %v164
    %v217 = vpack.c.b16 %v167, %v165
    %v218 = vpack.c.b16 %v170, %v168
    %v219 = vpack.c.b16 %v171, %v169
    %v220 = vpack.c.b16 %v174, %v172
    %v221 = vpack.c.b16 %v175, %v173
    %v222 = vpack.c.b16 %v178, %v176
    %v223 = vpack.c.b16 %v179, %v177
    %v224 = vpack.c.b16 %v182, %v180
    %v225 = vpack.c.b16 %v183, %v181
    %v226 = vpack.c.b16 %v186, %v184
    %v227 = vpack.c.b16 %v187, %v185
    %v228 = vpack.c.b16 %v190, %v188
    %v229 = vpack.c.b16 %v191, %v189
    %v230 = vpack.c.b16 %v194, %v192
    %v231 = vpack.c.b16 %v195, %v193
    %v232 = vpack.c.b16 %v198, %v196
    %v233 = vpack.c.b16 %v199, %v197
    %v234 = vpack.c.b16 %v202, %v200
    %v235 = vpack.c.b16 %v203, %v201
    %268 = vmatprep.subr.bf16.mxu0 %v219
    %269 = vmatpush1.bf16.msra.mxu0 %v218
    %270 = vmatprep.subr.bf16.mxu0 %v217
    %271 = vmatpush1.bf16.msra.mxu0 %v216
    %272 = vmatprep.subr.bf16.mxu0 %v215
    %273 = vmatpush1.bf16.msra.mxu0 %v214
    %274 = vmatprep.subr.bf16.mxu0 %v213
    %275 = vmatpush1.bf16.msra.mxu0 %v212
    %276 = vmatprep.subr.bf16.mxu0 %v211
    %277 = vmatpush1.bf16.msra.mxu0 %v210
    %278 = vmatprep.subr.bf16.mxu0 %v209
    %279 = vmatpush1.bf16.msra.mxu0 %v208
    %280 = vmatprep.subr.bf16.mxu0 %v207
    %281 = vmatpush1.bf16.msra.mxu0 %v206
    %282 = vmatprep.subr.bf16.mxu0 %v205
    %283 = vmatpush1.bf16.msra.mxu0 %v204
    %284 = vmatprep.subr.bf16.mxu0 %v235
    %285 = vmatpush2.bf16.msra.mxu0 %v234
    %286 = vmatprep.subr.bf16.mxu0 %v233
    %287 = vmatpush2.bf16.msra.mxu0 %v232
    %288 = vmatprep.subr.bf16.mxu0 %v231
    %289 = vmatpush2.bf16.msra.mxu0 %v230
    %290 = vmatprep.subr.bf16.mxu0 %v229
    %291 = vmatpush2.bf16.msra.mxu0 %v228
    %292 = vmatprep.subr.bf16.mxu0 %v227
    %293 = vmatpush2.bf16.msra.mxu0 %v226
    %294 = vmatprep.subr.bf16.mxu0 %v225
    %295 = vmatpush2.bf16.msra.mxu0 %v224
    %296 = vmatprep.subr.bf16.mxu0 %v223
    %297 = vmatpush2.bf16.msra.mxu0 %v222
    %298 = vmatprep.subr.bf16.mxu0 %v221
    %299 = vmatpush2.bf16.msra.mxu0 %v220
    %300 = vmatprep.mubr.bf16.mxu0 %v105
    %301 = vmatmul.mubr.bf16.gmra.mxu0 %v104
    %v302 = vpop.f32.mrf.mxu0
    %v303 = vadd.f32 %v93, %v302
    %v304 = vpop.f32.mrf.mxu0
    %v305 = vadd.f32 %v97, %v304
    %v306 = vpop.f32.mrf.mxu0
    %v307 = vadd.f32 %v93, %v306
    %v308 = vpop.f32.mrf.mxu0
    %v309 = vadd.f32 %v97, %v308
    %310 = vdwg.mxu0
    %v311 = vmul.f32 %v303, 0.5
    %v312 = vmul.f32 %v305, 0.5
    %v313 = vmul.f32 %v307, 0.5
    %v314 = vmul.f32 %v309, 0.5
    %v315 = vmul.f32 %v303, 0.70710677
    %v316 = vmul.f32 %v305, 0.70710677
    %v317 = vmul.f32 %v307, 0.70710677
    %v318 = vmul.f32 %v309, 0.70710677
    %v319 = verf.f32.pop %v315
    %v320 = verf.f32.pop %v316
    %v321 = verf.f32.pop %v317
    %v322 = verf.f32.pop %v318
    %v323 = vadd.f32 %v319, 1.0
    %v324 = vadd.f32 %v320, 1.0
    %v325 = vadd.f32 %v321, 1.0
    %v326 = vadd.f32 %v322, 1.0
    %v327 = vmul.f32 %v311, %v323
    %v328 = vmul.f32 %v312, %v324
    %v329 = vmul.f32 %v313, %v325
    %v330 = vmul.f32 %v314, %v326
    %v331 = vpack.c.bf16 %v329, %v327
    %v332 = vpack.c.bf16 %v330, %v328
    %v335 = vunpack.c.l.b16 %v331
    %v336 = vunpack.c.l.b16 %v332
    %v337 = vunpack.c.h.b16 %v331
    %v338 = vunpack.c.h.b16 %v332
    %v339 = vpack.c.b16 %v336, %v335
    %v340 = vpack.c.b16 %v338, %v337
    %343 = vst [vmem:[#allocation7] sm:$0xff] %v339
    %344 = vst [vmem:[#allocation7 + $0x8] sm:$0xff] %v340
    // Predicated region
    $region22: #{tpu_custom_call.1} parent=1 // pred_check
      _
    $region23: #{tpu_custom_call.1} parent=1 // pred_check_branch
      %346 = sbr.rel (0) target = $region25
    $region24: #{tpu_custom_call.1} parent=1 // pred_region
      %s348 = ssub.s32 256, 256
      %349 = vsyncadd [#allocation4], %s348
      %s350 = sshll.u32 [#allocation7], 4
      %s351 = int_to_ptr.vmem [resolvable:$true] %s350
      %356 = dma.vmem_to_hbm [thread:$0]  %s351, 256, %s3, [#allocation4], 128, 128, 8
    $region25: #{tpu_custom_call.1} parent=1 // pred_fallthru
      _
    // Predicated region
    $region26: #{tpu_custom_call.1} parent=1 // pred_check
      _
    $region27: #{tpu_custom_call.1} parent=1 // pred_check_branch
      %358 = sbr.rel (0) target = $region29
    $region28: #{tpu_custom_call.1} parent=1 // pred_region
      %359 = dma.done [#allocation4], 256
    $region29: #{tpu_custom_call.1} parent=1 // pred_fallthru
      _
    %360 = vsyncpa [#allocation3], 1
    %361 = vsyncpa [#allocation6], 1
    %362 = vsyncpa [#allocation4], 1

</llo_original>
